<compile_context>
chip_gen: v5e
topology: v5e:2x2
jax: 0.10.0
libtpu: 0.0.40
codegen_flags: <defaults>
</compile_context>

<pallas_src>
import functools

import jax
import jax.numpy as jnp
from jax import lax
from jax.experimental import pallas as pl
from jax.experimental.pallas import tpu as pltpu


def _mlp_kernel(u_ref, w_in_ref, b_in_ref, w_hid_ref, b_hid_ref,
                w_out_ref, b_out_ref, o_ref, *, num_hidden_layers):
    """Transposed, lane-dense MLP: activations are (features, batch_tile)."""
    # net_in: (hidden, dim) @ (dim, TB) -> (hidden, TB); bf16 MXU, f32 acc.
    x = jnp.dot(w_in_ref[...], u_ref[...].astype(jnp.bfloat16),
                preferred_element_type=jnp.float32)
    x = jnp.maximum(x + b_in_ref[...], 0.0)   # (out, 1) bias broadcasts along lanes

    # Shared hidden layer: hoist the weight/bias LOADS out of the loop, but
    # do NOT materialize a full (hidden, TB) bias tile (would pin vregs and
    # spill across the unrolled loop).
    w_hid = w_hid_ref[...]                    # bf16 (hidden, hidden)
    b_hid = b_hid_ref[...]                    # f32  (hidden, 1)

    def hidden_step(x):
        y = jnp.dot(w_hid, x.astype(jnp.bfloat16),
                    preferred_element_type=jnp.float32)
        return jnp.maximum(y + b_hid, 0.0)

    if num_hidden_layers <= 8:
        # Few layers: full static unroll keeps every vmatmul in one basic block.
        for _ in range(num_hidden_layers):
            x = hidden_step(x)
    else:
        # Many layers: bound live ranges while keeping scheduler visibility.
        x = lax.fori_loop(0, num_hidden_layers, lambda _, xx: hidden_step(xx),
                          x, unroll=4)

    # net_out: (dim, hidden) @ (hidden, TB) -> (dim, TB), no activation.
    y = jnp.dot(w_out_ref[...], x.astype(jnp.bfloat16),
                preferred_element_type=jnp.float32)
    o_ref[...] = (y + b_out_ref[...]).astype(o_ref.dtype)


def _vmem_capacity_bytes():
    try:
        return int(pltpu.get_tpu_info().vmem_capacity_bytes)
    except Exception:
        return 64 * 1024 * 1024   # conservative: v7x per-TensorCore VMEM


def _pick_batch_tile(batch, dim, hidden, vmem_budget):
    # Rough per-row footprint: double-buffered f32 input+output tiles plus a
    # few hidden-width f32 temporaries.
    bytes_per_row = 4 * (2 * dim + 2 * dim + 4 * hidden)
    max_rows = max(128, (vmem_budget // bytes_per_row) // 128 * 128)
    # Small problem: single grid step -> no per-step pipeline overhead
    # (best on single-TC v5e/v6e and for tiny workloads).
    if batch <= min(max_rows, 2048):
        return batch
    # Large batch: tile in multiples of 128 that divide the batch, preferring
    # >= 8 grid steps so v7x's two TensorCores each get several steps.
    start = (min(max_rows, batch) // 128) * 128
    cands = [tb for tb in range(start, 127, -128) if batch % tb == 0]
    if not cands:
        return batch
    multi = [tb for tb in cands if batch // tb >= 8]
    return multi[0] if multi else cands[0]


def mlp_forward(u, params, num_hidden_layers, *, batch_tile=None):
    """u: (batch, dim).  params: torch-layout weights (out, in), preferably
    pre-cast to bf16 via prepare_params; biases are (out, 1) f32."""
    batch, dim = u.shape
    hidden = params["w_hid"].shape[0]
    assert params["w_in"].shape == (hidden, dim)
    assert params["w_out"].shape == (dim, hidden)

    vmem_cap = _vmem_capacity_bytes()
    if batch_tile is None:
        batch_tile = _pick_batch_tile(batch, dim, hidden,
                                      vmem_budget=vmem_cap // 2)
    assert batch % batch_tile == 0, "batch must be divisible by batch_tile"
    grid = (batch // batch_tile,)

    # Lane-dense layout: present (features, batch) so the batch axis fills
    # the 128 lanes.  Transpose is wrapper-side layout plumbing.
    u_t = u.T                                           # (dim, batch)

    act_spec = pl.BlockSpec((dim, batch_tile), lambda i: (0, i))

    # Weights/biases: full-array blocks, VMEM-resident across grid steps
    # (constant index_map).  NOTE(scale-up): if hidden grows large, mark
    # these single-buffered (pl.Buffered(1)) to halve resident footprint on
    # v7x's 64 MiB VMEM; at hidden=16 the double-buffer cost is negligible.
    def resident(arr):
        return pl.BlockSpec(arr.shape, lambda i: (0, 0))

    kernel = functools.partial(_mlp_kernel,
                               num_hidden_layers=num_hidden_layers)

    flops = 2 * batch * (dim * hidden
                         + num_hidden_layers * hidden * hidden
                         + hidden * dim)
    bytes_accessed = (2 * batch * dim * u.dtype.itemsize
                      + sum(int(p.size) * p.dtype.itemsize
                            for p in params.values()))
    cost = pl.CostEstimate(flops=flops, transcendentals=0,
                           bytes_accessed=bytes_accessed)

    out_t = pl.pallas_call(
        kernel,
        out_shape=jax.ShapeDtypeStruct((dim, batch), u.dtype),
        grid_spec=pltpu.PrefetchScalarGridSpec(
            num_scalar_prefetch=0,
            grid=grid,
            in_specs=[
                act_spec,
                resident(params["w_in"]), resident(params["b_in"]),
                resident(params["w_hid"]), resident(params["b_hid"]),
                resident(params["w_out"]), resident(params["b_out"]),
            ],
            out_specs=act_spec,
        ),
        compiler_params=pltpu.CompilerParams(
            dimension_semantics=("parallel",),
            vmem_limit_bytes=int(vmem_cap * 3 // 4)),
        cost_estimate=cost,
    )(u_t,
      params["w_in"], params["b_in"],
      params["w_hid"], params["b_hid"],
      params["w_out"], params["b_out"])

    return out_t.T


def init_params(key, dim):
    """nn.Linear-style init: uniform(-1/sqrt(fan_in), 1/sqrt(fan_in)).
    Weights in torch layout (out_features, in_features); biases as
    (out_features, 1) columns for the transposed kernel layout."""
    hidden = dim // 2
    ks = jax.random.split(key, 6)

    def lin(kw, kb, fan_in, fan_out):
        bound = 1.0 / jnp.sqrt(jnp.float32(fan_in))
        w = jax.random.uniform(kw, (fan_out, fan_in), jnp.float32, -bound, bound)
        b = jax.random.uniform(kb, (fan_out, 1), jnp.float32, -bound, bound)
        return w, b

    w_in, b_in = lin(ks[0], ks[1], dim, hidden)
    w_hid, b_hid = lin(ks[2], ks[3], hidden, hidden)
    w_out, b_out = lin(ks[4], ks[5], hidden, dim)
    return {"w_in": w_in, "b_in": b_in,
            "w_hid": w_hid, "b_hid": b_hid,
            "w_out": w_out, "b_out": b_out}


def prepare_params(params_f32):
    """Pre-cast matmul weights to bf16 once (MXU-native); keep biases f32."""
    out = dict(params_f32)
    for k in ("w_in", "w_hid", "w_out"):
        out[k] = params_f32[k].astype(jnp.bfloat16)
    return out


def mlp_reference(u, params_f32, num_hidden_layers):
    """Pure-JAX reference in (batch, features) layout, mirroring the kernel's
    bf16-operand / f32-accumulate matmuls."""
    def lin(x, w, b):
        y = jnp.dot(x.astype(jnp.bfloat16), w.astype(jnp.bfloat16).T,
                    preferred_element_type=jnp.float32)
        return y + b.reshape(1, -1)

    x = jnp.maximum(lin(u, params_f32["w_in"], params_f32["b_in"]), 0.0)
    for _ in range(num_hidden_layers):
        x = jnp.maximum(lin(x, params_f32["w_hid"], params_f32["b_hid"]), 0.0)
    return lin(x, params_f32["w_out"], params_f32["b_out"])


if __name__ == "__main__":
    # MLP(dim=32, layers=3) -> hidden = 16, two shared hidden Linear+ReLU.
    dim = 32
    layers = 3
    num_hidden_layers = layers - 1
    batch = 256

    key = jax.random.PRNGKey(0)
    k_x, k_p = jax.random.split(key)
    u = jax.random.normal(k_x, (batch, dim), dtype=jnp.float32)

    params_f32 = init_params(k_p, dim)
    params = prepare_params(params_f32)      # bf16 weights, cast once

    out = mlp_forward(u, params, num_hidden_layers)
    out = jax.block_until_ready(out)

    ref = mlp_reference(u, params_f32, num_hidden_layers)
    assert out.shape == (batch, dim)
    assert out.dtype == u.dtype
    # bf16 MXU operands -> slightly looser tolerance than a pure-f32 check.
    assert jnp.allclose(out, ref, atol=1e-2, rtol=1e-2), "mismatch vs reference"

    print("KERNEL_OK")
</pallas_src>

<mosaic_0001>
module attributes {stable_mosaic.version = 11 : i64} {
  func.func @_mlp_kernel(%arg0: i32, %arg1: memref<32x256xf32, #tpu.memory_space<vmem>>, %arg2: memref<16x32xbf16, #tpu.memory_space<vmem>>, %arg3: memref<16x1xf32, #tpu.memory_space<vmem>>, %arg4: memref<16x16xbf16, #tpu.memory_space<vmem>>, %arg5: memref<16x1xf32, #tpu.memory_space<vmem>>, %arg6: memref<32x16xbf16, #tpu.memory_space<vmem>>, %arg7: memref<32x1xf32, #tpu.memory_space<vmem>>, %arg8: memref<32x256xf32, #tpu.memory_space<vmem>>) attributes {dimension_semantics = [#tpu.dimension_semantics<parallel>], iteration_bounds = array<i64: 1>, scalar_prefetch = 0 : i64, scratch_operands = 0 : i64, tpu.core_type = #tpu.core_type<tc>, window_params = [{transform_indices = @transform_0, window_bounds = array<i64: 32, 256>}, {pipeline_mode = #tpu.pipeline_mode<synchronous>, transform_indices = @transform_1, window_bounds = array<i64: 16, 32>}, {pipeline_mode = #tpu.pipeline_mode<synchronous>, transform_indices = @transform_2, window_bounds = array<i64: 16, 1>}, {pipeline_mode = #tpu.pipeline_mode<synchronous>, transform_indices = @transform_3, window_bounds = array<i64: 16, 16>}, {pipeline_mode = #tpu.pipeline_mode<synchronous>, transform_indices = @transform_4, window_bounds = array<i64: 16, 1>}, {pipeline_mode = #tpu.pipeline_mode<synchronous>, transform_indices = @transform_5, window_bounds = array<i64: 32, 16>}, {pipeline_mode = #tpu.pipeline_mode<synchronous>, transform_indices = @transform_6, window_bounds = array<i64: 32, 1>}, {transform_indices = @transform_7, window_bounds = array<i64: 32, 256>}]} {
    %c0 = arith.constant 0 : index
    %c0_0 = arith.constant 0 : index
    %0 = vector.load %arg2[%c0, %c0_0] : memref<16x32xbf16, #tpu.memory_space<vmem>>, vector<16x32xbf16>
    %c0_1 = arith.constant 0 : index
    %c0_2 = arith.constant 0 : index
    %1 = vector.load %arg1[%c0_1, %c0_2] : memref<32x256xf32, #tpu.memory_space<vmem>>, vector<32x256xf32>
    %2 = arith.truncf %1 : vector<32x256xf32> to vector<32x256xbf16>
    %cst = arith.constant dense<0.000000e+00> : vector<16x256xf32>
    %3 = tpu.matmul %0, %2, %cst {dimension_numbers = #tpu.dot_dimension_numbers<[1], [0], [0], [1], [0, 0, 1, 1], [], []>} : vector<16x32xbf16>, vector<32x256xbf16>, vector<16x256xf32> -> vector<16x256xf32>
    %c0_3 = arith.constant 0 : index
    %c0_4 = arith.constant 0 : index
    %4 = vector.load %arg3[%c0_3, %c0_4] : memref<16x1xf32, #tpu.memory_space<vmem>>, vector<16x1xf32>
    %5 = vector.broadcast %4 : vector<16x1xf32> to vector<16x256xf32>
    %6 = arith.addf %3, %5 : vector<16x256xf32>
    %cst_5 = arith.constant 0.000000e+00 : f32
    %7 = vector.broadcast %cst_5 : f32 to vector<16x256xf32>
    %8 = arith.maximumf %6, %7 : vector<16x256xf32>
    %c0_6 = arith.constant 0 : index
    %c0_7 = arith.constant 0 : index
    %9 = vector.load %arg4[%c0_6, %c0_7] : memref<16x16xbf16, #tpu.memory_space<vmem>>, vector<16x16xbf16>
    %c0_8 = arith.constant 0 : index
    %c0_9 = arith.constant 0 : index
    %10 = vector.load %arg5[%c0_8, %c0_9] : memref<16x1xf32, #tpu.memory_space<vmem>>, vector<16x1xf32>
    %11 = arith.truncf %8 : vector<16x256xf32> to vector<16x256xbf16>
    %cst_10 = arith.constant dense<0.000000e+00> : vector<16x256xf32>
    %12 = tpu.matmul %9, %11, %cst_10 {dimension_numbers = #tpu.dot_dimension_numbers<[1], [0], [0], [1], [0, 0, 1, 1], [], []>} : vector<16x16xbf16>, vector<16x256xbf16>, vector<16x256xf32> -> vector<16x256xf32>
    %13 = vector.broadcast %10 : vector<16x1xf32> to vector<16x256xf32>
    %14 = arith.addf %12, %13 : vector<16x256xf32>
    %cst_11 = arith.constant 0.000000e+00 : f32
    %15 = vector.broadcast %cst_11 : f32 to vector<16x256xf32>
    %16 = arith.maximumf %14, %15 : vector<16x256xf32>
    %17 = arith.truncf %16 : vector<16x256xf32> to vector<16x256xbf16>
    %cst_12 = arith.constant dense<0.000000e+00> : vector<16x256xf32>
    %18 = tpu.matmul %9, %17, %cst_12 {dimension_numbers = #tpu.dot_dimension_numbers<[1], [0], [0], [1], [0, 0, 1, 1], [], []>} : vector<16x16xbf16>, vector<16x256xbf16>, vector<16x256xf32> -> vector<16x256xf32>
    %19 = vector.broadcast %10 : vector<16x1xf32> to vector<16x256xf32>
    %20 = arith.addf %18, %19 : vector<16x256xf32>
    %cst_13 = arith.constant 0.000000e+00 : f32
    %21 = vector.broadcast %cst_13 : f32 to vector<16x256xf32>
    %22 = arith.maximumf %20, %21 : vector<16x256xf32>
    %c0_14 = arith.constant 0 : index
    %c0_15 = arith.constant 0 : index
    %23 = vector.load %arg6[%c0_14, %c0_15] : memref<32x16xbf16, #tpu.memory_space<vmem>>, vector<32x16xbf16>
    %24 = arith.truncf %22 : vector<16x256xf32> to vector<16x256xbf16>
    %cst_16 = arith.constant dense<0.000000e+00> : vector<32x256xf32>
    %25 = tpu.matmul %23, %24, %cst_16 {dimension_numbers = #tpu.dot_dimension_numbers<[1], [0], [0], [1], [0, 0, 1, 1], [], []>} : vector<32x16xbf16>, vector<16x256xbf16>, vector<32x256xf32> -> vector<32x256xf32>
    %c0_17 = arith.constant 0 : index
    %c0_18 = arith.constant 0 : index
    %26 = vector.load %arg7[%c0_17, %c0_18] : memref<32x1xf32, #tpu.memory_space<vmem>>, vector<32x1xf32>
    %27 = vector.broadcast %26 : vector<32x1xf32> to vector<32x256xf32>
    %28 = arith.addf %25, %27 : vector<32x256xf32>
    %c0_19 = arith.constant 0 : index
    %c0_20 = arith.constant 0 : index
    %29 = vector.load %arg8[%c0_19, %c0_20] : memref<32x256xf32, #tpu.memory_space<vmem>>, vector<32x256xf32>
    tpu.vector_store %arg8[%c0_19, %c0_20], %28 {strides = array<i32>} : memref<32x256xf32, #tpu.memory_space<vmem>>, vector<32x256xf32>,
    return
  }
  func.func @transform_0(%arg0: i32) -> (i32, i32) {
    %c0_i32 = arith.constant 0 : i32
    %c0_i32_0 = arith.constant 0 : i32
    return %c0_i32, %arg0 : i32, i32
  }
  func.func @transform_1(%arg0: i32) -> (i32, i32) {
    %c0_i32 = arith.constant 0 : i32
    %c0_i32_0 = arith.constant 0 : i32
    %c0_i32_1 = arith.constant 0 : i32
    return %c0_i32, %c0_i32_0 : i32, i32
  }
  func.func @transform_2(%arg0: i32) -> (i32, i32) {
    %c0_i32 = arith.constant 0 : i32
    %c0_i32_0 = arith.constant 0 : i32
    %c0_i32_1 = arith.constant 0 : i32
    return %c0_i32, %c0_i32_0 : i32, i32
  }
  func.func @transform_3(%arg0: i32) -> (i32, i32) {
    %c0_i32 = arith.constant 0 : i32
    %c0_i32_0 = arith.constant 0 : i32
    %c0_i32_1 = arith.constant 0 : i32
    return %c0_i32, %c0_i32_0 : i32, i32
  }
  func.func @transform_4(%arg0: i32) -> (i32, i32) {
    %c0_i32 = arith.constant 0 : i32
    %c0_i32_0 = arith.constant 0 : i32
    %c0_i32_1 = arith.constant 0 : i32
    return %c0_i32, %c0_i32_0 : i32, i32
  }
  func.func @transform_5(%arg0: i32) -> (i32, i32) {
    %c0_i32 = arith.constant 0 : i32
    %c0_i32_0 = arith.constant 0 : i32
    %c0_i32_1 = arith.constant 0 : i32
    return %c0_i32, %c0_i32_0 : i32, i32
  }
  func.func @transform_6(%arg0: i32) -> (i32, i32) {
    %c0_i32 = arith.constant 0 : i32
    %c0_i32_0 = arith.constant 0 : i32
    %c0_i32_1 = arith.constant 0 : i32
    return %c0_i32, %c0_i32_0 : i32, i32
  }
  func.func @transform_7(%arg0: i32) -> (i32, i32) {
    %c0_i32 = arith.constant 0 : i32
    %c0_i32_0 = arith.constant 0 : i32
    return %c0_i32, %arg0 : i32, i32
  }
}

</mosaic_0001>

<llo_original>
// kernel: tpu_custom_call.1
$region0: #{tpu_custom_call.1}
  #allocation0 [shape = 'u32[]', space=smem, size = 0x4, offset = 0x4, fixed_abs, tag = 'smem constant byte address 0x4 - core index']
  #allocation1 [shape = 'u32[72,128]{1,0:T(1,128)}', space=vmem, size = 0x9000, scoped, tag = 'internal scratch']
  %s0 = inlined_call_operand.vmem [shape: f32[32,256], index: 0, kind: input, shape index: {}]
  %s1 = inlined_call_operand.vmem [shape: bf16[16,32], index: 1, kind: input, shape index: {}]
  %s2 = inlined_call_operand.vmem [shape: f32[16,1], index: 2, kind: input, shape index: {}]
  %s3 = inlined_call_operand.vmem [shape: bf16[16,16], index: 3, kind: input, shape index: {}]
  %s4 = inlined_call_operand.vmem [shape: f32[16,1], index: 4, kind: input, shape index: {}]
  %s5 = inlined_call_operand.vmem [shape: bf16[32,16], index: 5, kind: input, shape index: {}]
  %s6 = inlined_call_operand.vmem [shape: f32[32,1], index: 6, kind: input, shape index: {}]
  %s7 = inlined_call_operand.hbm [shape: f32[32,256], index: 7, kind: output, shape index: {}]
  %s8 = sld [smem:[#allocation0]]
  $region38: #{tpu_custom_call.1} parent=0
    _
  %s10 = ssub.s32 1, %s8
  %s11 = scalar_select 0, %s10, %s8
  $region1: #{tpu_custom_call.1} parent=0
    #allocation2 [shape = 'u8[32768]{0}', space=vmem, size = 0x8000, scoped, tag = 'output window, operand 0, single buffered']
    #allocation3 [shape = 's32[1]{0}', space=sflag, size = 0x4, scoped, tag = 'scoped memory for tpu_custom_call.1']
    %12 = vsyncpa [#allocation3], 0
    // Predicated region
    $region2: #{tpu_custom_call.1} parent=1 // pred_check
      _
    $region3: #{tpu_custom_call.1} parent=1 // pred_check_branch
      %14 = sbr.rel (0) target = $region5
    $region4: #{tpu_custom_call.1} parent=1 // pred_region
      _
    $region5: #{tpu_custom_call.1} parent=1 // pred_fallthru
      _
    // Predicated region
    $region6: #{tpu_custom_call.1} parent=1 // pred_check
      _
    $region7: #{tpu_custom_call.1} parent=1 // pred_check_branch
      %16 = sbr.rel (0) target = $region9
    $region8: #{tpu_custom_call.1} parent=1 // pred_region
      _
    $region9: #{tpu_custom_call.1} parent=1 // pred_fallthru
      _
    // Predicated region
    $region10: #{tpu_custom_call.1} parent=1 // pred_check
      _
    $region11: #{tpu_custom_call.1} parent=1 // pred_check_branch
      %18 = sbr.rel (0) target = $region13
    $region12: #{tpu_custom_call.1} parent=1 // pred_region
      _
    $region13: #{tpu_custom_call.1} parent=1 // pred_fallthru
      _
    // Predicated region
    $region14: #{tpu_custom_call.1} parent=1 // pred_check
      _
    $region15: #{tpu_custom_call.1} parent=1 // pred_check_branch
      %20 = sbr.rel (0) target = $region17
    $region16: #{tpu_custom_call.1} parent=1 // pred_region
      _
    $region17: #{tpu_custom_call.1} parent=1 // pred_fallthru
      _
    // Predicated region
    $region18: #{tpu_custom_call.1} parent=1 // pred_check
      _
    $region19: #{tpu_custom_call.1} parent=1 // pred_check_branch
      %22 = sbr.rel (0) target = $region21
    $region20: #{tpu_custom_call.1} parent=1 // pred_region
      _
    $region21: #{tpu_custom_call.1} parent=1 // pred_fallthru
      _
    // Predicated region
    $region22: #{tpu_custom_call.1} parent=1 // pred_check
      _
    $region23: #{tpu_custom_call.1} parent=1 // pred_check_branch
      %24 = sbr.rel (0) target = $region25
    $region24: #{tpu_custom_call.1} parent=1 // pred_region
      _
    $region25: #{tpu_custom_call.1} parent=1 // pred_fallthru
      _
    // Predicated region
    $region26: #{tpu_custom_call.1} parent=1 // pred_check
      _
    $region27: #{tpu_custom_call.1} parent=1 // pred_check_branch
      %26 = sbr.rel (0) target = $region29
    $region28: #{tpu_custom_call.1} parent=1 // pred_region
      _
    $region29: #{tpu_custom_call.1} parent=1 // pred_fallthru
      _
    %v28 = vld [vmem:[%s1] sm:$0xf]
    %v29 = vld [vmem:[%s1 + $0x4] sm:$0xf]
    %v30 = vld [vmem:[%s0] sm:$0xff]
    %v31 = vld [vmem:[%s0 + $0x8] sm:$0xff]
    %v32 = vld [vmem:[%s0 + $0x10] sm:$0xff]
    %v33 = vld [vmem:[%s0 + $0x18] sm:$0xff]
    %v34 = vld [vmem:[%s0 + $0x20] sm:$0xff]
    %v35 = vld [vmem:[%s0 + $0x28] sm:$0xff]
    %v36 = vld [vmem:[%s0 + $0x30] sm:$0xff]
    %v37 = vld [vmem:[%s0 + $0x38] sm:$0xff]
    %v38 = vpack.c.bf16 %v32, %v30
    %v39 = vpack.c.bf16 %v33, %v31
    %v40 = vpack.c.bf16 %v36, %v34
    %v41 = vpack.c.bf16 %v37, %v35
    %v42 = vld [vmem:[%s2] sm:$0xff]
    %v43 = vld [vmem:[%s2 + $0x8] sm:$0xff]
    %45 = vset.pattern.permute.xlu0 0
    %46 = vperm.xlu0 %45, %v42
    %v47 = vpop.permute.xlu0 %46
    %50 = vset.pattern.permute.xlu0 0
    %51 = vperm.xlu0 %50, %v43
    %v52 = vpop.permute.xlu0 %51
    %v56 = vunpack.c.l.b16 %v28
    %v57 = vunpack.c.l.b16 %v29
    %v58 = vpack.c.b16 %v57, %v56
    %vm59 = vcmask 261120
    %v61 = vsel %vm59, %v58, 0
    %63 = vmatpush.bf16.msra.mxu0 0
    %64 = vmatpush.bf16.msra.mxu0 0
    %65 = vmatpush.bf16.msra.mxu0 0
    %66 = vmatpush.bf16.msra.mxu0 0
    %67 = vmatpush.bf16.msra.mxu0 0
    %68 = vmatpush.bf16.msra.mxu0 0
    %69 = vmatpush.bf16.msra.mxu0 %v40
    %70 = vmatpush.bf16.msra.mxu0 %v38
    %71 = vmatmul.bf16.gmra.mxu0 %v61
    %v72 = vpop.f32.mrf.mxu0
    %v73 = vadd.f32 %v47, %v72
    %v74 = vpop.f32.mrf.mxu0
    %v75 = vadd.f32 %v52, %v74
    %76 = vdwg.mxu0
    %77 = vmatpush.bf16.msra.mxu0 0
    %78 = vmatpush.bf16.msra.mxu0 0
    %79 = vmatpush.bf16.msra.mxu0 0
    %80 = vmatpush.bf16.msra.mxu0 0
    %81 = vmatpush.bf16.msra.mxu0 0
    %82 = vmatpush.bf16.msra.mxu0 0
    %83 = vmatpush.bf16.msra.mxu0 %v41
    %84 = vmatpush.bf16.msra.mxu0 %v39
    %85 = vmatmul.bf16.gmra.mxu0 %v61
    %v86 = vpop.f32.mrf.mxu0
    %v87 = vadd.f32 %v47, %v86
    %v88 = vpop.f32.mrf.mxu0
    %v89 = vadd.f32 %v52, %v88
    %90 = vdwg.mxu0
    %v91 = vmax.f32 %v73, 0.0
    %v92 = vmax.f32 %v87, 0.0
    %v93 = vmax.f32 %v75, 0.0
    %v94 = vmax.f32 %v89, 0.0
    %v95 = vld [vmem:[%s3] sm:$0xf]
    %v96 = vld [vmem:[%s3 + $0x4] sm:$0xf]
    %v97 = vld [vmem:[%s4] sm:$0xff]
    %v98 = vld [vmem:[%s4 + $0x8] sm:$0xff]
    %v99 = vpack.c.bf16 %v93, %v91
    %v100 = vpack.c.bf16 %v94, %v92
    %102 = vset.pattern.permute.xlu0 0
    %103 = vperm.xlu0 %102, %v97
    %v104 = vpop.permute.xlu0 %103
    %107 = vset.pattern.permute.xlu0 0
    %108 = vperm.xlu0 %107, %v98
    %v109 = vpop.permute.xlu0 %108
    %v113 = vunpack.c.l.b16 %v95
    %v114 = vunpack.c.l.b16 %v96
    %v115 = vpack.c.b16 %v114, %v113
    %vm116 = vcmask 130048
    %v118 = vsel %vm116, %v115, 0
    %120 = vmatpush.bf16.msra.mxu0 0
    %121 = vmatpush.bf16.msra.mxu0 0
    %122 = vmatpush.bf16.msra.mxu0 0
    %123 = vmatpush.bf16.msra.mxu0 0
    %124 = vmatpush.bf16.msra.mxu0 0
    %125 = vmatpush.bf16.msra.mxu0 0
    %126 = vmatpush.bf16.msra.mxu0 0
    %127 = vmatpush.bf16.msra.mxu0 %v99
    %128 = vmatmul.bf16.gmra.mxu0 %v118
    %v129 = vpop.f32.mrf.mxu0
    %v130 = vadd.f32 %v104, %v129
    %v131 = vpop.f32.mrf.mxu0
    %v132 = vadd.f32 %v109, %v131
    %133 = vdwg.mxu0
    %134 = vmatpush.bf16.msra.mxu0 0
    %135 = vmatpush.bf16.msra.mxu0 0
    %136 = vmatpush.bf16.msra.mxu0 0
    %137 = vmatpush.bf16.msra.mxu0 0
    %138 = vmatpush.bf16.msra.mxu0 0
    %139 = vmatpush.bf16.msra.mxu0 0
    %140 = vmatpush.bf16.msra.mxu0 0
    %141 = vmatpush.bf16.msra.mxu0 %v100
    %142 = vmatmul.bf16.gmra.mxu0 %v118
    %v143 = vpop.f32.mrf.mxu0
    %v144 = vadd.f32 %v104, %v143
    %v145 = vpop.f32.mrf.mxu0
    %v146 = vadd.f32 %v109, %v145
    %147 = vdwg.mxu0
    %v148 = vmax.f32 %v130, 0.0
    %v149 = vmax.f32 %v144, 0.0
    %v150 = vmax.f32 %v132, 0.0
    %v151 = vmax.f32 %v146, 0.0
    %v152 = vpack.c.bf16 %v150, %v148
    %v153 = vpack.c.bf16 %v151, %v149
    %154 = vmatpush.bf16.msra.mxu0 0
    %155 = vmatpush.bf16.msra.mxu0 0
    %156 = vmatpush.bf16.msra.mxu0 0
    %157 = vmatpush.bf16.msra.mxu0 0
    %158 = vmatpush.bf16.msra.mxu0 0
    %159 = vmatpush.bf16.msra.mxu0 0
    %160 = vmatpush.bf16.msra.mxu0 0
    %161 = vmatpush.bf16.msra.mxu0 %v152
    %162 = vmatmul.bf16.gmra.mxu0 %v118
    %v163 = vpop.f32.mrf.mxu0
    %v164 = vadd.f32 %v104, %v163
    %v165 = vpop.f32.mrf.mxu0
    %v166 = vadd.f32 %v109, %v165
    %167 = vdwg.mxu0
    %168 = vmatpush.bf16.msra.mxu0 0
    %169 = vmatpush.bf16.msra.mxu0 0
    %170 = vmatpush.bf16.msra.mxu0 0
    %171 = vmatpush.bf16.msra.mxu0 0
    %172 = vmatpush.bf16.msra.mxu0 0
    %173 = vmatpush.bf16.msra.mxu0 0
    %174 = vmatpush.bf16.msra.mxu0 0
    %175 = vmatpush.bf16.msra.mxu0 %v153
    %176 = vmatmul.bf16.gmra.mxu0 %v118
    %v177 = vpop.f32.mrf.mxu0
    %v178 = vadd.f32 %v104, %v177
    %v179 = vpop.f32.mrf.mxu0
    %v180 = vadd.f32 %v109, %v179
    %181 = vdwg.mxu0
    %v182 = vmax.f32 %v164, 0.0
    %v183 = vmax.f32 %v178, 0.0
    %v184 = vmax.f32 %v166, 0.0
    %v185 = vmax.f32 %v180, 0.0
    %v186 = vld [vmem:[%s5] sm:$0xf]
    %v187 = vld [vmem:[%s5 + $0x4] sm:$0xf]
    %v188 = vld [vmem:[%s5 + $0x8] sm:$0xf]
    %v189 = vld [vmem:[%s5 + $0xc] sm:$0xf]
    %v190 = vpack.c.bf16 %v184, %v182
    %v191 = vpack.c.bf16 %v185, %v183
    %v192 = vld [vmem:[%s6] sm:$0xff]
    %v193 = vld [vmem:[%s6 + $0x8] sm:$0xff]
    %v194 = vld [vmem:[%s6 + $0x10] sm:$0xff]
    %v195 = vld [vmem:[%s6 + $0x18] sm:$0xff]
    %197 = vset.pattern.permute.xlu0 0
    %198 = vperm.xlu0 %197, %v192
    %v199 = vpop.permute.xlu0 %198
    %202 = vset.pattern.permute.xlu0 0
    %203 = vperm.xlu0 %202, %v193
    %v204 = vpop.permute.xlu0 %203
    %207 = vset.pattern.permute.xlu0 0
    %208 = vperm.xlu0 %207, %v194
    %v209 = vpop.permute.xlu0 %208
    %212 = vset.pattern.permute.xlu0 0
    %213 = vperm.xlu0 %212, %v195
    %v214 = vpop.permute.xlu0 %213
    %v220 = vunpack.c.l.b16 %v186
    %v221 = vunpack.c.l.b16 %v187
    %v222 = vunpack.c.l.b16 %v188
    %v223 = vunpack.c.l.b16 %v189
    %v224 = vpack.c.b16 %v221, %v220
    %v225 = vpack.c.b16 %v223, %v222
    %v227 = vsel %vm116, %v224, 0
    %v230 = vsel %vm116, %v225, 0
    %232 = vmatpush.bf16.msra.mxu0 0
    %233 = vmatpush.bf16.msra.mxu0 0
    %234 = vmatpush.bf16.msra.mxu0 0
    %235 = vmatpush.bf16.msra.mxu0 0
    %236 = vmatpush.bf16.msra.mxu0 0
    %237 = vmatpush.bf16.msra.mxu0 0
    %238 = vmatpush.bf16.msra.mxu0 0
    %239 = vmatpush.bf16.msra.mxu0 %v190
    %240 = vmatmul.bf16.gmra.mxu0 %v227
    %v241 = vpop.f32.mrf.mxu0
    %v242 = vadd.f32 %v199, %v241
    %v243 = vpop.f32.mrf.mxu0
    %v244 = vadd.f32 %v204, %v243
    %245 = vmatmul.bf16.gmra.mxu0 %v230
    %v246 = vpop.f32.mrf.mxu0
    %v247 = vadd.f32 %v209, %v246
    %v248 = vpop.f32.mrf.mxu0
    %v249 = vadd.f32 %v214, %v248
    %250 = vdwg.mxu0
    %251 = vmatpush.bf16.msra.mxu0 0
    %252 = vmatpush.bf16.msra.mxu0 0
    %253 = vmatpush.bf16.msra.mxu0 0
    %254 = vmatpush.bf16.msra.mxu0 0
    %255 = vmatpush.bf16.msra.mxu0 0
    %256 = vmatpush.bf16.msra.mxu0 0
    %257 = vmatpush.bf16.msra.mxu0 0
    %258 = vmatpush.bf16.msra.mxu0 %v191
    %259 = vmatmul.bf16.gmra.mxu0 %v227
    %v260 = vpop.f32.mrf.mxu0
    %v261 = vadd.f32 %v199, %v260
    %v262 = vpop.f32.mrf.mxu0
    %v263 = vadd.f32 %v204, %v262
    %264 = vmatmul.bf16.gmra.mxu0 %v230
    %v265 = vpop.f32.mrf.mxu0
    %v266 = vadd.f32 %v209, %v265
    %v267 = vpop.f32.mrf.mxu0
    %v268 = vadd.f32 %v214, %v267
    %269 = vdwg.mxu0
    %270 = vst [vmem:[#allocation2] sm:$0xff] %v242
    %271 = vst [vmem:[#allocation2 + $0x8] sm:$0xff] %v261
    %272 = vst [vmem:[#allocation2 + $0x10] sm:$0xff] %v244
    %273 = vst [vmem:[#allocation2 + $0x18] sm:$0xff] %v263
    %274 = vst [vmem:[#allocation2 + $0x20] sm:$0xff] %v247
    %275 = vst [vmem:[#allocation2 + $0x28] sm:$0xff] %v266
    %276 = vst [vmem:[#allocation2 + $0x30] sm:$0xff] %v249
    %277 = vst [vmem:[#allocation2 + $0x38] sm:$0xff] %v268
    // Predicated region
    $region30: #{tpu_custom_call.1} parent=1 // pred_check
      _
    $region31: #{tpu_custom_call.1} parent=1 // pred_check_branch
      %279 = sbr.rel (0) target = $region33
    $region32: #{tpu_custom_call.1} parent=1 // pred_region
      %281 = vsyncadd [#allocation3], 0
      %s282 = sshll.u32 [#allocation2], 4
      %s283 = int_to_ptr.vmem [resolvable:$true] %s282
      %s284 = sshll.u32 %s7, 4
      %s285 = int_to_ptr.hbm [resolvable:$true] %s284
      %290 = dma.vmem_to_hbm [thread:$0]  %s283, 1024, %s285, [#allocation3], 256, 256, 16
    $region33: #{tpu_custom_call.1} parent=1 // pred_fallthru
      _
    // Predicated region
    $region34: #{tpu_custom_call.1} parent=1 // pred_check
      _
    $region35: #{tpu_custom_call.1} parent=1 // pred_check_branch
      %292 = sbr.rel (0) target = $region37
    $region36: #{tpu_custom_call.1} parent=1 // pred_region
      %294 = dma.done [#allocation3], 1024
    $region37: #{tpu_custom_call.1} parent=1 // pred_fallthru
      _
    %295 = vsyncpa [#allocation3], 1

</llo_original>
